<compile_context>
chip_gen: v6e
topology: v6e:2x2x1
jax: 0.10.0
libtpu: 0.0.40
codegen_flags: <defaults>
</compile_context>

<pallas_src>
import functools

import jax
import jax.numpy as jnp
from jax.experimental import pallas as pl
from jax.experimental.pallas import tpu as pltpu


def _mhsa_head_kernel(x_ref, wq_ref, bq_ref, wk_ref, bk_ref, wv_ref, bv_ref,
                      wo_ref, bo_ref, out_ref, attn_ref, *, causal, inv_scale):
    h = pl.program_id(1)

    x = x_ref[0]                                   # (T, D) f32
    T = x.shape[0]

    wq = wq_ref[0]                                 # (D, hd)  -- already transposed
    wk = wk_ref[0]                                 # (D, hd)
    wv = wv_ref[0]                                 # (D, hd)
    wo = wo_ref[0]                                 # (hd, D)  -- already transposed

    # Per-head projections (PyTorch Linear: x @ W.T + b). Scale folded into q once.
    q = (jnp.dot(x, wq, preferred_element_type=jnp.float32) + bq_ref[0]) * inv_scale
    k = jnp.dot(x, wk, preferred_element_type=jnp.float32) + bk_ref[0]
    v = jnp.dot(x, wv, preferred_element_type=jnp.float32) + bv_ref[0]

    # scores[i, j] = sum_d q[i, d] * k[j, d]  -- contraction on last dim of both,
    # lowers straight to the MXU without an explicit (T, hd) transpose.
    scores = jax.lax.dot_general(q, k, (((1,), (1,)), ((), ())),
                                 preferred_element_type=jnp.float32)   # (T, T)

    if causal:
        row = jax.lax.broadcasted_iota(jnp.int32, (T, T), 0)
        col = jax.lax.broadcasted_iota(jnp.int32, (T, T), 1)
        scores = jnp.where(col <= row, scores, -1e30)   # finite mask (NaN-safe)

    # Numerically-stable softmax; reciprocal on the EUP instead of VALU divides.
    m = jnp.max(scores, axis=-1, keepdims=True)
    e = jnp.exp(scores - m)
    denom = jnp.sum(e, axis=-1, keepdims=True)
    attn = e * pl.reciprocal(denom, approx=True)

    # TODO(synk): nn.Dropout on attn weights is identity here (eval-mode semantics).
    attn_ref[0, 0] = attn

    head_out = jnp.dot(attn, v, preferred_element_type=jnp.float32)       # (T, hd)
    contrib = jnp.dot(head_out, wo, preferred_element_type=jnp.float32)   # (T, D)

    # Accumulate the output projection per head into the resident (T, D) block.
    @pl.when(h == 0)
    def _():
        out_ref[0] = bo_ref[...] + contrib

    @pl.when(h != 0)
    def _():
        out_ref[0] = out_ref[0] + contrib


def multi_head_self_attention(x, params, *, num_heads, causal=False):
    """x: (B, T, D) float32. Returns (out (B,T,D), attn_weights (B,H,T,T))."""
    B, T, D = x.shape
    assert D % num_heads == 0, "embedding dim must be divisible by num_heads"
    hd = D // num_heads
    inv_scale = 1.0 / float(hd ** 0.5)

    wq, bq, wk, bk, wv, bv, wo, bo = params

    # Pre-transpose + pre-split weights per head (once, in the wrapper):
    #   q/k/v: W.T reshaped so head h picks its (D, hd) column block.
    #   out:   W.T reshaped so head h picks its (hd, D) row block.
    def qkv_prep(w, b):
        wt = jnp.transpose(w)                                   # (D_in, D_out)
        wt = wt.reshape(D, num_heads, hd).transpose(1, 0, 2)    # (H, D, hd)
        return wt, b.reshape(num_heads, 1, hd)                  # (H, 1, hd)

    wq_h, bq_h = qkv_prep(wq, bq)
    wk_h, bk_h = qkv_prep(wk, bk)
    wv_h, bv_h = qkv_prep(wv, bv)
    wo_h = jnp.transpose(wo).reshape(num_heads, hd, D)          # (H, hd, D)
    bo2 = bo.reshape(1, D)

    kernel = functools.partial(_mhsa_head_kernel, causal=causal, inv_scale=inv_scale)

    w_qkv_spec = pl.BlockSpec((1, D, hd), lambda b, h: (h, 0, 0))
    b_qkv_spec = pl.BlockSpec((1, 1, hd), lambda b, h: (h, 0, 0))

    # Advisory cost estimate for the XLA scheduler.
    flops = B * (8 * T * D * D + 4 * T * T * D)
    transcendentals = B * num_heads * T * T
    bytes_accessed = 4 * (B * T * D * 2 + 4 * D * D + 4 * D + B * num_heads * T * T)
    cost = pl.CostEstimate(flops=flops, transcendentals=transcendentals,
                           bytes_accessed=bytes_accessed)

    # VMEM budget from actual per-step block sizes (double-buffered) with headroom.
    block_bytes = 4 * (T * D                      # x
                       + 3 * (D * hd + hd)        # q/k/v weights + biases
                       + hd * D + D               # out-proj weight + bias
                       + T * D                    # out block
                       + T * T)                   # attn block
    vmem_limit = int(min(64 * 1024 * 1024, max(32 * 1024 * 1024, 8 * block_bytes)))

    out, attn = pl.pallas_call(
        kernel,
        out_shape=(
            jax.ShapeDtypeStruct((B, T, D), jnp.float32),
            jax.ShapeDtypeStruct((B, num_heads, T, T), jnp.float32),
        ),
        grid_spec=pltpu.PrefetchScalarGridSpec(
            num_scalar_prefetch=0,
            grid=(B, num_heads),
            in_specs=[
                pl.BlockSpec((1, T, D), lambda b, h: (b, 0, 0)),    # x (reused across h)
                w_qkv_spec, b_qkv_spec,                             # q_proj (per head)
                w_qkv_spec, b_qkv_spec,                             # k_proj (per head)
                w_qkv_spec, b_qkv_spec,                             # v_proj (per head)
                pl.BlockSpec((1, hd, D), lambda b, h: (h, 0, 0)),   # out_proj rows (per head)
                pl.BlockSpec((1, D), lambda b, h: (0, 0)),          # out_proj bias
            ],
            out_specs=[
                # Same block across the head axis -> resident accumulator.
                pl.BlockSpec((1, T, D), lambda b, h: (b, 0, 0)),
                pl.BlockSpec((1, 1, T, T), lambda b, h: (b, h, 0, 0)),
            ],
        ),
        compiler_params=pltpu.CompilerParams(
            dimension_semantics=("parallel", "arbitrary"),
            vmem_limit_bytes=vmem_limit),
        cost_estimate=cost,
    )(x, wq_h, bq_h, wk_h, bk_h, wv_h, bv_h, wo_h, bo2)
    return out, attn


def _reference(x, params, num_heads, causal):
    """Pure-JAX reference mirroring the PyTorch forward (dropout in eval mode)."""
    B, T, D = x.shape
    hd = D // num_heads
    wq, bq, wk, bk, wv, bv, wo, bo = params
    q = x @ wq.T + bq
    k = x @ wk.T + bk
    v = x @ wv.T + bv
    q = q.reshape(B, T, num_heads, hd).transpose(0, 2, 1, 3)
    k = k.reshape(B, T, num_heads, hd).transpose(0, 2, 1, 3)
    v = v.reshape(B, T, num_heads, hd).transpose(0, 2, 1, 3)
    scores = jnp.einsum("bhqd,bhkd->bhqk", q, k) / (hd ** 0.5)
    if causal:
        mask = jnp.tril(jnp.ones((T, T)))
        scores = jnp.where(mask == 0, -jnp.inf, scores)
    attn = jax.nn.softmax(scores, axis=-1)
    out = jnp.einsum("bhqk,bhkd->bhqd", attn, v)
    out = out.transpose(0, 2, 1, 3).reshape(B, T, D)
    return out @ wo.T + bo, attn


if __name__ == "__main__":
    B, T, D = 2, 8, 32
    num_heads = 4

    key = jax.random.PRNGKey(0)
    keys = jax.random.split(key, 9)
    x = jax.random.normal(keys[0], (B, T, D), dtype=jnp.float32)

    def init_linear(kw, kb, out_f, in_f):
        bound = 1.0 / (in_f ** 0.5)
        w = jax.random.uniform(kw, (out_f, in_f), jnp.float32, -bound, bound)
        b = jax.random.uniform(kb, (out_f,), jnp.float32, -bound, bound)
        return w, b

    wq, bq = init_linear(keys[1], keys[2], D, D)
    wk, bk = init_linear(keys[3], keys[4], D, D)
    wv, bv = init_linear(keys[5], keys[6], D, D)
    wo, bo = init_linear(keys[7], keys[8], D, D)
    params = (wq, bq, wk, bk, wv, bv, wo, bo)

    for causal in (False, True):
        out, attn = multi_head_self_attention(x, params, num_heads=num_heads,
                                              causal=causal)
        jax.block_until_ready((out, attn))

        ref_out, ref_attn = _reference(x, params, num_heads, causal)
        # approx reciprocal in the softmax -> slightly looser (still tight) tolerance
        assert jnp.allclose(out, ref_out, atol=5e-3, rtol=5e-3), f"out mismatch (causal={causal})"
        assert jnp.allclose(attn, ref_attn, atol=5e-3, rtol=5e-3), f"attn mismatch (causal={causal})"

    print("KERNEL_OK")
</pallas_src>

<mosaic_0001>
module attributes {stable_mosaic.version = 11 : i64} {
  func.func @_mhsa_head_kernel(%arg0: i32, %arg1: i32, %arg2: memref<1x8x32xf32, #tpu.memory_space<vmem>>, %arg3: memref<1x32x8xf32, #tpu.memory_space<vmem>>, %arg4: memref<1x1x8xf32, #tpu.memory_space<vmem>>, %arg5: memref<1x32x8xf32, #tpu.memory_space<vmem>>, %arg6: memref<1x1x8xf32, #tpu.memory_space<vmem>>, %arg7: memref<1x32x8xf32, #tpu.memory_space<vmem>>, %arg8: memref<1x1x8xf32, #tpu.memory_space<vmem>>, %arg9: memref<1x8x32xf32, #tpu.memory_space<vmem>>, %arg10: memref<1x32xf32, #tpu.memory_space<vmem>>, %arg11: memref<1x8x32xf32, #tpu.memory_space<vmem>>, %arg12: memref<1x1x8x8xf32, #tpu.memory_space<vmem>>) attributes {dimension_semantics = [#tpu.dimension_semantics<parallel>, #tpu.dimension_semantics<arbitrary>], iteration_bounds = array<i64: 2, 4>, scalar_prefetch = 0 : i64, scratch_operands = 0 : i64, tpu.core_type = #tpu.core_type<tc>, window_params = [{transform_indices = @transform_0, window_bounds = array<i64: 1, 8, 32>}, {transform_indices = @transform_1, window_bounds = array<i64: 1, 32, 8>}, {transform_indices = @transform_2, window_bounds = array<i64: 1, 1, 8>}, {transform_indices = @transform_3, window_bounds = array<i64: 1, 32, 8>}, {transform_indices = @transform_4, window_bounds = array<i64: 1, 1, 8>}, {transform_indices = @transform_5, window_bounds = array<i64: 1, 32, 8>}, {transform_indices = @transform_6, window_bounds = array<i64: 1, 1, 8>}, {transform_indices = @transform_7, window_bounds = array<i64: 1, 8, 32>}, {pipeline_mode = #tpu.pipeline_mode<synchronous>, transform_indices = @transform_8, window_bounds = array<i64: 1, 32>}, {transform_indices = @transform_9, window_bounds = array<i64: 1, 8, 32>}, {transform_indices = @transform_10, window_bounds = array<i64: 1, 1, 8, 8>}]} {
    %c0 = arith.constant 0 : index
    %c0_0 = arith.constant 0 : index
    %c0_1 = arith.constant 0 : index
    %0 = vector.load %arg2[%c0, %c0_0, %c0_1] : memref<1x8x32xf32, #tpu.memory_space<vmem>>, vector<1x8x32xf32>
    %1 = vector.shape_cast %0 : vector<1x8x32xf32> to vector<8x32xf32>
    %c0_2 = arith.constant 0 : index
    %c0_3 = arith.constant 0 : index
    %c0_4 = arith.constant 0 : index
    %2 = vector.load %arg3[%c0_2, %c0_3, %c0_4] : memref<1x32x8xf32, #tpu.memory_space<vmem>>, vector<1x32x8xf32>
    %3 = vector.shape_cast %2 : vector<1x32x8xf32> to vector<32x8xf32>
    %c0_5 = arith.constant 0 : index
    %c0_6 = arith.constant 0 : index
    %c0_7 = arith.constant 0 : index
    %4 = vector.load %arg5[%c0_5, %c0_6, %c0_7] : memref<1x32x8xf32, #tpu.memory_space<vmem>>, vector<1x32x8xf32>
    %5 = vector.shape_cast %4 : vector<1x32x8xf32> to vector<32x8xf32>
    %c0_8 = arith.constant 0 : index
    %c0_9 = arith.constant 0 : index
    %c0_10 = arith.constant 0 : index
    %6 = vector.load %arg7[%c0_8, %c0_9, %c0_10] : memref<1x32x8xf32, #tpu.memory_space<vmem>>, vector<1x32x8xf32>
    %7 = vector.shape_cast %6 : vector<1x32x8xf32> to vector<32x8xf32>
    %c0_11 = arith.constant 0 : index
    %c0_12 = arith.constant 0 : index
    %c0_13 = arith.constant 0 : index
    %8 = vector.load %arg9[%c0_11, %c0_12, %c0_13] : memref<1x8x32xf32, #tpu.memory_space<vmem>>, vector<1x8x32xf32>
    %9 = vector.shape_cast %8 : vector<1x8x32xf32> to vector<8x32xf32>
    %cst = arith.constant dense<0.000000e+00> : vector<8x8xf32>
    %10 = tpu.matmul %1, %3, %cst {dimension_numbers = #tpu.dot_dimension_numbers<[1], [0], [0], [1], [0, 0, 1, 1], [], []>} : vector<8x32xf32>, vector<32x8xf32>, vector<8x8xf32> -> vector<8x8xf32>
    %c0_14 = arith.constant 0 : index
    %c0_15 = arith.constant 0 : index
    %c0_16 = arith.constant 0 : index
    %11 = vector.load %arg4[%c0_14, %c0_15, %c0_16] : memref<1x1x8xf32, #tpu.memory_space<vmem>>, vector<1x1x8xf32>
    %12 = vector.shape_cast %11 : vector<1x1x8xf32> to vector<1x8xf32>
    %13 = vector.broadcast %12 : vector<1x8xf32> to vector<8x8xf32>
    %14 = arith.addf %10, %13 : vector<8x8xf32>
    %cst_17 = arith.constant 0.353553385 : f32
    %15 = vector.broadcast %cst_17 : f32 to vector<8x8xf32>
    %16 = arith.mulf %14, %15 : vector<8x8xf32>
    %cst_18 = arith.constant dense<0.000000e+00> : vector<8x8xf32>
    %17 = tpu.matmul %1, %5, %cst_18 {dimension_numbers = #tpu.dot_dimension_numbers<[1], [0], [0], [1], [0, 0, 1, 1], [], []>} : vector<8x32xf32>, vector<32x8xf32>, vector<8x8xf32> -> vector<8x8xf32>
    %c0_19 = arith.constant 0 : index
    %c0_20 = arith.constant 0 : index
    %c0_21 = arith.constant 0 : index
    %18 = vector.load %arg6[%c0_19, %c0_20, %c0_21] : memref<1x1x8xf32, #tpu.memory_space<vmem>>, vector<1x1x8xf32>
    %19 = vector.shape_cast %18 : vector<1x1x8xf32> to vector<1x8xf32>
    %20 = vector.broadcast %19 : vector<1x8xf32> to vector<8x8xf32>
    %21 = arith.addf %17, %20 : vector<8x8xf32>
    %cst_22 = arith.constant dense<0.000000e+00> : vector<8x8xf32>
    %22 = tpu.matmul %1, %7, %cst_22 {dimension_numbers = #tpu.dot_dimension_numbers<[1], [0], [0], [1], [0, 0, 1, 1], [], []>} : vector<8x32xf32>, vector<32x8xf32>, vector<8x8xf32> -> vector<8x8xf32>
    %c0_23 = arith.constant 0 : index
    %c0_24 = arith.constant 0 : index
    %c0_25 = arith.constant 0 : index
    %23 = vector.load %arg8[%c0_23, %c0_24, %c0_25] : memref<1x1x8xf32, #tpu.memory_space<vmem>>, vector<1x1x8xf32>
    %24 = vector.shape_cast %23 : vector<1x1x8xf32> to vector<1x8xf32>
    %25 = vector.broadcast %24 : vector<1x8xf32> to vector<8x8xf32>
    %26 = arith.addf %22, %25 : vector<8x8xf32>
    %cst_26 = arith.constant dense<0.000000e+00> : vector<8x8xf32>
    %27 = tpu.matmul %16, %21, %cst_26 {dimension_numbers = #tpu.dot_dimension_numbers<[1], [1], [0], [0], [0, 0, 1, 0], [], []>} : vector<8x8xf32>, vector<8x8xf32>, vector<8x8xf32> -> vector<8x8xf32>
    %cst_27 = arith.constant dense<0xFF800000> : vector<8xf32>
    %28 = vector.multi_reduction <maximumf>, %27, %cst_27 [1] : vector<8x8xf32> to vector<8xf32>
    %29 = vector.shape_cast %28 : vector<8xf32> to vector<8x1xf32>
    %30 = vector.broadcast %29 : vector<8x1xf32> to vector<8x8xf32>
    %31 = arith.subf %27, %30 : vector<8x8xf32>
    %32 = math.exp %31 : vector<8x8xf32>
    %cst_28 = arith.constant dense<0.000000e+00> : vector<8xf32>
    %33 = vector.multi_reduction <add>, %32, %cst_28 [1] : vector<8x8xf32> to vector<8xf32>
    %34 = vector.shape_cast %33 : vector<8xf32> to vector<8x1xf32>
    %35 = tpu.reciprocal %34 {approx = true} : vector<8x1xf32> -> vector<8x1xf32>
    %36 = vector.broadcast %35 : vector<8x1xf32> to vector<8x8xf32>
    %37 = arith.mulf %32, %36 : vector<8x8xf32>
    %c0_29 = arith.constant 0 : index
    %c0_30 = arith.constant 0 : index
    %c0_31 = arith.constant 0 : index
    %c0_32 = arith.constant 0 : index
    %38 = vector.load %arg12[%c0_29, %c0_30, %c0_31, %c0_32] : memref<1x1x8x8xf32, #tpu.memory_space<vmem>>, vector<1x1x8x8xf32>
    %39 = vector.shape_cast %38 : vector<1x1x8x8xf32> to vector<8x8xf32>
    %40 = vector.shape_cast %37 : vector<8x8xf32> to vector<1x1x8x8xf32>
    tpu.vector_store %arg12[%c0_29, %c0_30, %c0_31, %c0_32], %40 {strides = array<i32>} : memref<1x1x8x8xf32, #tpu.memory_space<vmem>>, vector<1x1x8x8xf32>,
    %cst_33 = arith.constant dense<0.000000e+00> : vector<8x8xf32>
    %41 = tpu.matmul %37, %26, %cst_33 {dimension_numbers = #tpu.dot_dimension_numbers<[1], [0], [0], [1], [0, 0, 1, 1], [], []>} : vector<8x8xf32>, vector<8x8xf32>, vector<8x8xf32> -> vector<8x8xf32>
    %cst_34 = arith.constant dense<0.000000e+00> : vector<8x32xf32>
    %42 = tpu.matmul %41, %9, %cst_34 {dimension_numbers = #tpu.dot_dimension_numbers<[1], [0], [0], [1], [0, 0, 1, 1], [], []>} : vector<8x8xf32>, vector<8x32xf32>, vector<8x32xf32> -> vector<8x32xf32>
    %c0_i32 = arith.constant 0 : i32
    %43 = arith.cmpi eq, %arg1, %c0_i32 : i32
    %44 = arith.extui %43 : i1 to i32
    %c0_i32_35 = arith.constant 0 : i32
    %45 = arith.cmpi ne, %44, %c0_i32_35 : i32
    scf.if %45 {
      %c0_38 = arith.constant 0 : index
      %c0_39 = arith.constant 0 : index
      %49 = vector.load %arg10[%c0_38, %c0_39] : memref<1x32xf32, #tpu.memory_space<vmem>>, vector<1x32xf32>
      %50 = vector.broadcast %49 : vector<1x32xf32> to vector<8x32xf32>
      %51 = arith.addf %50, %42 : vector<8x32xf32>
      %c0_40 = arith.constant 0 : index
      %c0_41 = arith.constant 0 : index
      %c0_42 = arith.constant 0 : index
      %52 = vector.load %arg11[%c0_40, %c0_41, %c0_42] : memref<1x8x32xf32, #tpu.memory_space<vmem>>, vector<1x8x32xf32>
      %53 = vector.shape_cast %52 : vector<1x8x32xf32> to vector<8x32xf32>
      %54 = vector.shape_cast %51 : vector<8x32xf32> to vector<1x8x32xf32>
      tpu.vector_store %arg11[%c0_40, %c0_41, %c0_42], %54 {strides = array<i32>} : memref<1x8x32xf32, #tpu.memory_space<vmem>>, vector<1x8x32xf32>,
    } else {
    }
    %c0_i32_36 = arith.constant 0 : i32
    %46 = arith.cmpi ne, %arg1, %c0_i32_36 : i32
    %47 = arith.extui %46 : i1 to i32
    %c0_i32_37 = arith.constant 0 : i32
    %48 = arith.cmpi ne, %47, %c0_i32_37 : i32
    scf.if %48 {
      %c0_38 = arith.constant 0 : index
      %c0_39 = arith.constant 0 : index
      %c0_40 = arith.constant 0 : index
      %49 = vector.load %arg11[%c0_38, %c0_39, %c0_40] : memref<1x8x32xf32, #tpu.memory_space<vmem>>, vector<1x8x32xf32>
      %50 = vector.shape_cast %49 : vector<1x8x32xf32> to vector<8x32xf32>
      %51 = arith.addf %50, %42 : vector<8x32xf32>
      %c0_41 = arith.constant 0 : index
      %c0_42 = arith.constant 0 : index
      %c0_43 = arith.constant 0 : index
      %52 = vector.load %arg11[%c0_41, %c0_42, %c0_43] : memref<1x8x32xf32, #tpu.memory_space<vmem>>, vector<1x8x32xf32>
      %53 = vector.shape_cast %52 : vector<1x8x32xf32> to vector<8x32xf32>
      %54 = vector.shape_cast %51 : vector<8x32xf32> to vector<1x8x32xf32>
      tpu.vector_store %arg11[%c0_41, %c0_42, %c0_43], %54 {strides = array<i32>} : memref<1x8x32xf32, #tpu.memory_space<vmem>>, vector<1x8x32xf32>,
    } else {
    }
    return
  }
  func.func @transform_0(%arg0: i32, %arg1: i32) -> (i32, i32, i32) {
    %c0_i32 = arith.constant 0 : i32
    %c0_i32_0 = arith.constant 0 : i32
    %c0_i32_1 = arith.constant 0 : i32
    return %arg0, %c0_i32, %c0_i32_0 : i32, i32, i32
  }
  func.func @transform_1(%arg0: i32, %arg1: i32) -> (i32, i32, i32) {
    %c0_i32 = arith.constant 0 : i32
    %c0_i32_0 = arith.constant 0 : i32
    %c0_i32_1 = arith.constant 0 : i32
    return %arg1, %c0_i32, %c0_i32_0 : i32, i32, i32
  }
  func.func @transform_2(%arg0: i32, %arg1: i32) -> (i32, i32, i32) {
    %c0_i32 = arith.constant 0 : i32
    %c0_i32_0 = arith.constant 0 : i32
    %c0_i32_1 = arith.constant 0 : i32
    return %arg1, %c0_i32, %c0_i32_0 : i32, i32, i32
  }
  func.func @transform_3(%arg0: i32, %arg1: i32) -> (i32, i32, i32) {
    %c0_i32 = arith.constant 0 : i32
    %c0_i32_0 = arith.constant 0 : i32
    %c0_i32_1 = arith.constant 0 : i32
    return %arg1, %c0_i32, %c0_i32_0 : i32, i32, i32
  }
  func.func @transform_4(%arg0: i32, %arg1: i32) -> (i32, i32, i32) {
    %c0_i32 = arith.constant 0 : i32
    %c0_i32_0 = arith.constant 0 : i32
    %c0_i32_1 = arith.constant 0 : i32
    return %arg1, %c0_i32, %c0_i32_0 : i32, i32, i32
  }
  func.func @transform_5(%arg0: i32, %arg1: i32) -> (i32, i32, i32) {
    %c0_i32 = arith.constant 0 : i32
    %c0_i32_0 = arith.constant 0 : i32
    %c0_i32_1 = arith.constant 0 : i32
    return %arg1, %c0_i32, %c0_i32_0 : i32, i32, i32
  }
  func.func @transform_6(%arg0: i32, %arg1: i32) -> (i32, i32, i32) {
    %c0_i32 = arith.constant 0 : i32
    %c0_i32_0 = arith.constant 0 : i32
    %c0_i32_1 = arith.constant 0 : i32
    return %arg1, %c0_i32, %c0_i32_0 : i32, i32, i32
  }
  func.func @transform_7(%arg0: i32, %arg1: i32) -> (i32, i32, i32) {
    %c0_i32 = arith.constant 0 : i32
    %c0_i32_0 = arith.constant 0 : i32
    %c0_i32_1 = arith.constant 0 : i32
    return %arg1, %c0_i32, %c0_i32_0 : i32, i32, i32
  }
  func.func @transform_8(%arg0: i32, %arg1: i32) -> (i32, i32) {
    %c0_i32 = arith.constant 0 : i32
    %c0_i32_0 = arith.constant 0 : i32
    %c0_i32_1 = arith.constant 0 : i32
    return %c0_i32, %c0_i32_0 : i32, i32
  }
  func.func @transform_9(%arg0: i32, %arg1: i32) -> (i32, i32, i32) {
    %c0_i32 = arith.constant 0 : i32
    %c0_i32_0 = arith.constant 0 : i32
    %c0_i32_1 = arith.constant 0 : i32
    return %arg0, %c0_i32, %c0_i32_0 : i32, i32, i32
  }
  func.func @transform_10(%arg0: i32, %arg1: i32) -> (i32, i32, i32, i32) {
    %c0_i32 = arith.constant 0 : i32
    %c0_i32_0 = arith.constant 0 : i32
    %c0_i32_1 = arith.constant 0 : i32
    return %arg0, %arg1, %c0_i32, %c0_i32_0 : i32, i32, i32, i32
  }
}

</mosaic_0001>

<llo_original>
// kernel: tpu_custom_call.1
$region0: #{tpu_custom_call.1}
  #allocation0 [shape = 'u32[]', space=smem, size = 0x4, offset = 0x4, fixed_abs, tag = 'smem constant byte address 0x4 - core index']
  #allocation1 [shape = 'u32[144,128]{1,0:T(1,128)}', space=vmem, size = 0x12000, scoped, tag = 'internal scratch']
  %s0 = inlined_call_operand.vmem [shape: f32[2,8,32], index: 0, kind: input, shape index: {}]
  %s1 = inlined_call_operand.vmem [shape: f32[4,32,8], index: 1, kind: input, shape index: {}]
  %s2 = inlined_call_operand.vmem [shape: f32[4,1,8], index: 2, kind: input, shape index: {}]
  %s3 = inlined_call_operand.vmem [shape: f32[4,32,8], index: 3, kind: input, shape index: {}]
  %s4 = inlined_call_operand.vmem [shape: f32[4,1,8], index: 4, kind: input, shape index: {}]
  %s5 = inlined_call_operand.vmem [shape: f32[4,32,8], index: 5, kind: input, shape index: {}]
  %s6 = inlined_call_operand.vmem [shape: f32[4,1,8], index: 6, kind: input, shape index: {}]
  %s7 = inlined_call_operand.vmem [shape: f32[4,8,32], index: 7, kind: input, shape index: {}]
  %s8 = inlined_call_operand.vmem [shape: f32[1,32], index: 8, kind: input, shape index: {}]
  %s9 = inlined_call_operand.hbm [shape: f32[2,8,32], index: 9, kind: output, shape index: {0}]
  %s10 = inlined_call_operand.hbm [shape: f32[2,4,8,8], index: 10, kind: output, shape index: {1}]
  %11 = xla_tuple %s9, %s10
  %s12 = sld [smem:[#allocation0]]
  $region85: #{tpu_custom_call.1} parent=0
    _
  %s14 = ssub.s32 1, %s12
  %s15 = scalar_select 0, %s14, %s12
  $region1: #{tpu_custom_call.1} parent=0
    #allocation2 [shape = 'u8[8192]{0}', space=vmem, size = 0x2000, scoped, tag = 'output window, operand 0']
    #allocation3 [shape = 's32[2]{0}', space=sflag, size = 0x8, scoped, tag = 'scoped memory for tpu_custom_call.1']
    #allocation4 [shape = 'u8[8192]{0}', space=vmem, size = 0x2000, scoped, tag = 'output window, operand 1']
    #allocation5 [shape = 's32[2]{0}', space=sflag, size = 0x8, scoped, tag = 'scoped memory for tpu_custom_call.1']
    %16 = vsyncpa [#allocation3], 0
    %s17 = scalar_lea.sflag [#allocation3], 1
    %18 = vsyncpa %s17, 0
    %19 = vsyncpa [#allocation5], 0
    %s20 = scalar_lea.sflag [#allocation5], 1
    %21 = vsyncpa %s20, 0
    loop: start=0, step=1, limit=10
    $region2: #{tpu_custom_call.1} parent=1 // loop_pre_header
      _
    $region3: #{tpu_custom_call.1} parent=1 // loop_header
      %s23 = sphi 0, %s27
      %p24 = scmp.ge.s32.totalorder %s23, 10
      %s30 = sphi 0, %s42
      %s31 = sphi 0, %s38
      %s32 = sphi 0, %s30
      %s33 = sphi 0, %s31
      %s34 = sphi 0, %s32
      %s35 = sphi 0, %s33
      %s45 = sphi 0, %s47
      %s48 = sphi 0, %s45
      %s49 = sphi 0, %s48
      %s65 = sphi 0, %s49
      %s71 = sphi 0, %s73
      %s74 = sphi 0, %s71
      %s75 = sphi 0, %s74
      %s91 = sphi 0, %s75
      %s97 = sphi 0, %s99
      %s100 = sphi 0, %s97
      %s101 = sphi 0, %s100
      %s117 = sphi 0, %s101
      %s123 = sphi 0, %s125
      %s126 = sphi 0, %s123
      %s127 = sphi 0, %s126
      %s143 = sphi 0, %s127
      %s149 = sphi 0, %s151
      %s152 = sphi 0, %s149
      %s153 = sphi 0, %s152
      %s169 = sphi 0, %s153
      %s175 = sphi 0, %s177
      %s178 = sphi 0, %s175
      %s179 = sphi 0, %s178
      %s195 = sphi 0, %s179
      %s201 = sphi 0, %s203
      %s204 = sphi 0, %s201
      %s205 = sphi 0, %s204
      %s221 = sphi 0, %s205
      %s227 = sphi 0, %s229
      %s230 = sphi 0, %s227
      %s231 = sphi 0, %s230
      %s247 = sphi 0, %s231
      %s251 = sphi 0, %s251
      %s253 = sphi 0, %s251
      %s254 = sphi 0, %s253
      %s268 = sphi 0, %s254
      %s274 = sphi 0, %s276
      %s277 = sphi 0, %s274
      %s278 = sphi 0, %s277
      %s294 = sphi 0, %s278
      %s302 = sphi 0, %s304
      %s305 = sphi 0, %s302
      %s306 = sphi 0, %s305
      %s322 = sphi 0, %s306
    $region4: #{tpu_custom_call.1} parent=1 // loop_header_branch
      %26 = sbr.rel (%p24) target = $region8
    $region5: #{tpu_custom_call.1} parent=1 // loop_body
      %s28 = ssub.s32 %s23, 1
      %s29 = ssub.s32 %s23, 2
      %s36 = sadd.s32 1, %s31
      %p37 = scmp.ge.s32.totalorder %s36, 4
      %s38 = scalar_select %p37, 0, %s36
      %s39 = sadd.s32 1, %s30
      %s40 = scalar_select %p37, %s39, %s30
      %p41 = scmp.ge.s32.totalorder %s40, 2
      %s42 = scalar_select %p41, 0, %s40
      %s43 = ssub.s32 %s30, %s42
      %p44 = scmp.eq.s32.totalorder %s43, 0
      %s46 = sadd.s32 %s45, 1
      %s47 = scalar_select %p44, %s45, %s46
      %p50 = pneg %p44
      %p51 = scmp.eq.s32.totalorder %s23, 7
      %p52 = por %p50, %p51
      %p53 = scmp.ne.s32.totalorder %s45, %s48
      %p54 = scmp.eq.s32.totalorder %s23, 0
      %p55 = por %p53, %p54
      %p56 = scmp.ne.s32.totalorder %s45, %s48
      %p57 = scmp.eq.s32.totalorder %s28, 7
      %p58 = por %p56, %p57
      %p59 = scmp.ne.s32.totalorder %s48, %s49
      %p60 = scmp.eq.s32.totalorder %s28, 0
      %p61 = por %p59, %p60
      %p62 = scmp.ne.s32.totalorder %s48, %s49
      %p63 = scmp.eq.s32.totalorder %s29, 7
      %p64 = por %p62, %p63
      %p66 = scmp.ne.s32.totalorder %s49, %s65
      %p67 = scmp.eq.s32.totalorder %s29, 0
      %p68 = por %p66, %p67
      %s69 = ssub.s32 %s31, %s38
      %p70 = scmp.eq.s32.totalorder %s69, 0
      %s72 = sadd.s32 %s71, 1
      %s73 = scalar_select %p70, %s71, %s72
      %p76 = pneg %p70
      %p77 = scmp.eq.s32.totalorder %s23, 7
      %p78 = por %p76, %p77
      %p79 = scmp.ne.s32.totalorder %s71, %s74
      %p80 = scmp.eq.s32.totalorder %s23, 0
      %p81 = por %p79, %p80
      %p82 = scmp.ne.s32.totalorder %s71, %s74
      %p83 = scmp.eq.s32.totalorder %s28, 7
      %p84 = por %p82, %p83
      %p85 = scmp.ne.s32.totalorder %s74, %s75
      %p86 = scmp.eq.s32.totalorder %s28, 0
      %p87 = por %p85, %p86
      %p88 = scmp.ne.s32.totalorder %s74, %s75
      %p89 = scmp.eq.s32.totalorder %s29, 7
      %p90 = por %p88, %p89
      %p92 = scmp.ne.s32.totalorder %s75, %s91
      %p93 = scmp.eq.s32.totalorder %s29, 0
      %p94 = por %p92, %p93
      %s95 = ssub.s32 %s31, %s38
      %p96 = scmp.eq.s32.totalorder %s95, 0
      %s98 = sadd.s32 %s97, 1
      %s99 = scalar_select %p96, %s97, %s98
      %p102 = pneg %p96
      %p103 = scmp.eq.s32.totalorder %s23, 7
      %p104 = por %p102, %p103
      %p105 = scmp.ne.s32.totalorder %s97, %s100
      %p106 = scmp.eq.s32.totalorder %s23, 0
      %p107 = por %p105, %p106
      %p108 = scmp.ne.s32.totalorder %s97, %s100
      %p109 = scmp.eq.s32.totalorder %s28, 7
      %p110 = por %p108, %p109
      %p111 = scmp.ne.s32.totalorder %s100, %s101
      %p112 = scmp.eq.s32.totalorder %s28, 0
      %p113 = por %p111, %p112
      %p114 = scmp.ne.s32.totalorder %s100, %s101
      %p115 = scmp.eq.s32.totalorder %s29, 7
      %p116 = por %p114, %p115
      %p118 = scmp.ne.s32.totalorder %s101, %s117
      %p119 = scmp.eq.s32.totalorder %s29, 0
      %p120 = por %p118, %p119
      %s121 = ssub.s32 %s31, %s38
      %p122 = scmp.eq.s32.totalorder %s121, 0
      %s124 = sadd.s32 %s123, 1
      %s125 = scalar_select %p122, %s123, %s124
      %p128 = pneg %p122
      %p129 = scmp.eq.s32.totalorder %s23, 7
      %p130 = por %p128, %p129
      %p131 = scmp.ne.s32.totalorder %s123, %s126
      %p132 = scmp.eq.s32.totalorder %s23, 0
      %p133 = por %p131, %p132
      %p134 = scmp.ne.s32.totalorder %s123, %s126
      %p135 = scmp.eq.s32.totalorder %s28, 7
      %p136 = por %p134, %p135
      %p137 = scmp.ne.s32.totalorder %s126, %s127
      %p138 = scmp.eq.s32.totalorder %s28, 0
      %p139 = por %p137, %p138
      %p140 = scmp.ne.s32.totalorder %s126, %s127
      %p141 = scmp.eq.s32.totalorder %s29, 7
      %p142 = por %p140, %p141
      %p144 = scmp.ne.s32.totalorder %s127, %s143
      %p145 = scmp.eq.s32.totalorder %s29, 0
      %p146 = por %p144, %p145
      %s147 = ssub.s32 %s31, %s38
      %p148 = scmp.eq.s32.totalorder %s147, 0
      %s150 = sadd.s32 %s149, 1
      %s151 = scalar_select %p148, %s149, %s150
      %p154 = pneg %p148
      %p155 = scmp.eq.s32.totalorder %s23, 7
      %p156 = por %p154, %p155
      %p157 = scmp.ne.s32.totalorder %s149, %s152
      %p158 = scmp.eq.s32.totalorder %s23, 0
      %p159 = por %p157, %p158
      %p160 = scmp.ne.s32.totalorder %s149, %s152
      %p161 = scmp.eq.s32.totalorder %s28, 7
      %p162 = por %p160, %p161
      %p163 = scmp.ne.s32.totalorder %s152, %s153
      %p164 = scmp.eq.s32.totalorder %s28, 0
      %p165 = por %p163, %p164
      %p166 = scmp.ne.s32.totalorder %s152, %s153
      %p167 = scmp.eq.s32.totalorder %s29, 7
      %p168 = por %p166, %p167
      %p170 = scmp.ne.s32.totalorder %s153, %s169
      %p171 = scmp.eq.s32.totalorder %s29, 0
      %p172 = por %p170, %p171
      %s173 = ssub.s32 %s31, %s38
      %p174 = scmp.eq.s32.totalorder %s173, 0
      %s176 = sadd.s32 %s175, 1
      %s177 = scalar_select %p174, %s175, %s176
      %p180 = pneg %p174
      %p181 = scmp.eq.s32.totalorder %s23, 7
      %p182 = por %p180, %p181
      %p183 = scmp.ne.s32.totalorder %s175, %s178
      %p184 = scmp.eq.s32.totalorder %s23, 0
      %p185 = por %p183, %p184
      %p186 = scmp.ne.s32.totalorder %s175, %s178
      %p187 = scmp.eq.s32.totalorder %s28, 7
      %p188 = por %p186, %p187
      %p189 = scmp.ne.s32.totalorder %s178, %s179
      %p190 = scmp.eq.s32.totalorder %s28, 0
      %p191 = por %p189, %p190
      %p192 = scmp.ne.s32.totalorder %s178, %s179
      %p193 = scmp.eq.s32.totalorder %s29, 7
      %p194 = por %p192, %p193
      %p196 = scmp.ne.s32.totalorder %s179, %s195
      %p197 = scmp.eq.s32.totalorder %s29, 0
      %p198 = por %p196, %p197
      %s199 = ssub.s32 %s31, %s38
      %p200 = scmp.eq.s32.totalorder %s199, 0
      %s202 = sadd.s32 %s201, 1
      %s203 = scalar_select %p200, %s201, %s202
      %p206 = pneg %p200
      %p207 = scmp.eq.s32.totalorder %s23, 7
      %p208 = por %p206, %p207
      %p209 = scmp.ne.s32.totalorder %s201, %s204
      %p210 = scmp.eq.s32.totalorder %s23, 0
      %p211 = por %p209, %p210
      %p212 = scmp.ne.s32.totalorder %s201, %s204
      %p213 = scmp.eq.s32.totalorder %s28, 7
      %p214 = por %p212, %p213
      %p215 = scmp.ne.s32.totalorder %s204, %s205
      %p216 = scmp.eq.s32.totalorder %s28, 0
      %p217 = por %p215, %p216
      %p218 = scmp.ne.s32.totalorder %s204, %s205
      %p219 = scmp.eq.s32.totalorder %s29, 7
      %p220 = por %p218, %p219
      %p222 = scmp.ne.s32.totalorder %s205, %s221
      %p223 = scmp.eq.s32.totalorder %s29, 0
      %p224 = por %p222, %p223
      %s225 = ssub.s32 %s31, %s38
      %p226 = scmp.eq.s32.totalorder %s225, 0
      %s228 = sadd.s32 %s227, 1
      %s229 = scalar_select %p226, %s227, %s228
      %p232 = pneg %p226
      %p233 = scmp.eq.s32.totalorder %s23, 7
      %p234 = por %p232, %p233
      %p235 = scmp.ne.s32.totalorder %s227, %s230
      %p236 = scmp.eq.s32.totalorder %s23, 0
      %p237 = por %p235, %p236
      %p238 = scmp.ne.s32.totalorder %s227, %s230
      %p239 = scmp.eq.s32.totalorder %s28, 7
      %p240 = por %p238, %p239
      %p241 = scmp.ne.s32.totalorder %s230, %s231
      %p242 = scmp.eq.s32.totalorder %s28, 0
      %p243 = por %p241, %p242
      %p244 = scmp.ne.s32.totalorder %s230, %s231
      %p245 = scmp.eq.s32.totalorder %s29, 7
      %p246 = por %p244, %p245
      %p248 = scmp.ne.s32.totalorder %s231, %s247
      %p249 = scmp.eq.s32.totalorder %s29, 0
      %p250 = por %p248, %p249
      %s252 = sadd.s32 %s251, 1
      %p255 = scmp.eq.s32.totalorder %s23, 7
      %p256 = scmp.ne.s32.totalorder %s251, %s253
      %p257 = scmp.eq.s32.totalorder %s23, 0
      %p258 = por %p256, %p257
      %p259 = scmp.ne.s32.totalorder %s251, %s253
      %p260 = scmp.eq.s32.totalorder %s28, 7
      %p261 = por %p259, %p260
      %p262 = scmp.ne.s32.totalorder %s253, %s254
      %p263 = scmp.eq.s32.totalorder %s28, 0
      %p264 = por %p262, %p263
      %p265 = scmp.ne.s32.totalorder %s253, %s254
      %p266 = scmp.eq.s32.totalorder %s29, 7
      %p267 = por %p265, %p266
      %p269 = scmp.ne.s32.totalorder %s254, %s268
      %p270 = scmp.eq.s32.totalorder %s29, 0
      %p271 = por %p269, %p270
      %s272 = ssub.s32 %s30, %s42
      %p273 = scmp.eq.s32.totalorder %s272, 0
      %s275 = sadd.s32 %s274, 1
      %s276 = scalar_select %p273, %s274, %s275
      %p279 = pneg %p273
      %p280 = scmp.eq.s32.totalorder %s23, 7
      %p281 = por %p279, %p280
      %p282 = scmp.ne.s32.totalorder %s274, %s277
      %p283 = scmp.eq.s32.totalorder %s23, 0
      %p284 = por %p282, %p283
      %p285 = scmp.ne.s32.totalorder %s274, %s277
      %p286 = scmp.eq.s32.totalorder %s28, 7
      %p287 = por %p285, %p286
      %p288 = scmp.ne.s32.totalorder %s277, %s278
      %p289 = scmp.eq.s32.totalorder %s28, 0
      %p290 = por %p288, %p289
      %p291 = scmp.ne.s32.totalorder %s277, %s278
      %p292 = scmp.eq.s32.totalorder %s29, 7
      %p293 = por %p291, %p292
      %p295 = scmp.ne.s32.totalorder %s278, %s294
      %p296 = scmp.eq.s32.totalorder %s29, 0
      %p297 = por %p295, %p296
      %s298 = ssub.s32 %s30, %s42
      %s299 = ssub.s32 %s31, %s38
      %s300 = sor.u32 %s298, %s299
      %p301 = scmp.eq.s32.totalorder %s300, 0
      %s303 = sadd.s32 %s302, 1
      %s304 = scalar_select %p301, %s302, %s303
      %p307 = pneg %p301
      %p308 = scmp.eq.s32.totalorder %s23, 7
      %p309 = por %p307, %p308
      %p310 = scmp.ne.s32.totalorder %s302, %s305
      %p311 = scmp.eq.s32.totalorder %s23, 0
      %p312 = por %p310, %p311
      %p313 = scmp.ne.s32.totalorder %s302, %s305
      %p314 = scmp.eq.s32.totalorder %s28, 7
      %p315 = por %p313, %p314
      %p316 = scmp.ne.s32.totalorder %s305, %s306
      %p317 = scmp.eq.s32.totalorder %s28, 0
      %p318 = por %p316, %p317
      %p319 = scmp.ne.s32.totalorder %s305, %s306
      %p320 = scmp.eq.s32.totalorder %s29, 7
      %p321 = por %p319, %p320
      %p323 = scmp.ne.s32.totalorder %s306, %s322
      %p324 = scmp.eq.s32.totalorder %s29, 0
      %p325 = por %p323, %p324
      %p326 = scmp.le.s32.totalorder 1, %s23
      %p327 = scmp.lt.s32.totalorder %s23, 9
      %p328 = pnand %p326, %p327
      %p329 = pneg %p328
      // Predicated region
      $region9: #{tpu_custom_call.1} parent=5 // pred_check
        _
      $region10: #{tpu_custom_call.1} parent=5 // pred_check_branch
        %331 = sbr.rel (%p328) target = $region12
      $region11: #{tpu_custom_call.1} parent=5 // pred_region
        %s332 = ssub.s32 %s23, 1
        // Predicated region
        $region13: #{tpu_custom_call.1} parent=11 // pred_check
          %p333 = pneg %p264
        $region14: #{tpu_custom_call.1} parent=11 // pred_check_branch
          %335 = sbr.rel (%p333) target = $region16
        $region15: #{tpu_custom_call.1} parent=11 // pred_region
          _
        $region16: #{tpu_custom_call.1} parent=11 // pred_fallthru
          _
      $region12: #{tpu_custom_call.1} parent=5 // pred_fallthru
        _
      %p336 = scmp.lt.s32.totalorder %s23, 8
      // Predicated region
      $region17: #{tpu_custom_call.1} parent=5 // pred_check
        %p337 = pneg %p336
      $region18: #{tpu_custom_call.1} parent=5 // pred_check_branch
        %339 = sbr.rel (%p337) target = $region20
      $region19: #{tpu_custom_call.1} parent=5 // pred_region
        // Predicated region
        $region21: #{tpu_custom_call.1} parent=19 // pred_check
          %p340 = pneg %p55
        $region22: #{tpu_custom_call.1} parent=19 // pred_check_branch
          %342 = sbr.rel (%p340) target = $region24
        $region23: #{tpu_custom_call.1} parent=19 // pred_region
          %p343 = scmp.lt.s32.totalorder %s30, 1
          %s344 = scalar_select %p343, %s30, 1
          %s345 = smul.addr %s344, 8
          %s346 = scalar_lea.vmem %s0, %s345
        $region24: #{tpu_custom_call.1} parent=19 // pred_fallthru
          _
        // Predicated region
        $region25: #{tpu_custom_call.1} parent=19 // pred_check
          %p347 = pneg %p81
        $region26: #{tpu_custom_call.1} parent=19 // pred_check_branch
          %349 = sbr.rel (%p347) target = $region28
        $region27: #{tpu_custom_call.1} parent=19 // pred_region
          %p350 = scmp.lt.s32.totalorder %s31, 3
          %s351 = scalar_select %p350, %s31, 3
          %s352 = smul.addr %s351, 4
          %s353 = smul.addr %s352, 8
          %s354 = scalar_lea.vmem %s1, %s353
        $region28: #{tpu_custom_call.1} parent=19 // pred_fallthru
          _
        // Predicated region
        $region29: #{tpu_custom_call.1} parent=19 // pred_check
          %p355 = pneg %p107
        $region30: #{tpu_custom_call.1} parent=19 // pred_check_branch
          %357 = sbr.rel (%p355) target = $region32
        $region31: #{tpu_custom_call.1} parent=19 // pred_region
          %p358 = scmp.lt.s32.totalorder %s31, 3
          %s359 = scalar_select %p358, %s31, 3
          %s360 = scalar_lea.vmem %s2, %s359
        $region32: #{tpu_custom_call.1} parent=19 // pred_fallthru
          _
        // Predicated region
        $region33: #{tpu_custom_call.1} parent=19 // pred_check
          %p361 = pneg %p133
        $region34: #{tpu_custom_call.1} parent=19 // pred_check_branch
          %363 = sbr.rel (%p361) target = $region36
        $region35: #{tpu_custom_call.1} parent=19 // pred_region
          %p364 = scmp.lt.s32.totalorder %s31, 3
          %s365 = scalar_select %p364, %s31, 3
          %s366 = smul.addr %s365, 4
          %s367 = smul.addr %s366, 8
          %s368 = scalar_lea.vmem %s3, %s367
        $region36: #{tpu_custom_call.1} parent=19 // pred_fallthru
          _
        // Predicated region
        $region37: #{tpu_custom_call.1} parent=19 // pred_check
          %p369 = pneg %p159
        $region38: #{tpu_custom_call.1} parent=19 // pred_check_branch
          %371 = sbr.rel (%p369) target = $region40
        $region39: #{tpu_custom_call.1} parent=19 // pred_region
          %p372 = scmp.lt.s32.totalorder %s31, 3
          %s373 = scalar_select %p372, %s31, 3
          %s374 = scalar_lea.vmem %s4, %s373
        $region40: #{tpu_custom_call.1} parent=19 // pred_fallthru
          _
        // Predicated region
        $region41: #{tpu_custom_call.1} parent=19 // pred_check
          %p375 = pneg %p185
        $region42: #{tpu_custom_call.1} parent=19 // pred_check_branch
          %377 = sbr.rel (%p375) target = $region44
        $region43: #{tpu_custom_call.1} parent=19 // pred_region
          %p378 = scmp.lt.s32.totalorder %s31, 3
          %s379 = scalar_select %p378, %s31, 3
          %s380 = smul.addr %s379, 4
          %s381 = smul.addr %s380, 8
          %s382 = scalar_lea.vmem %s5, %s381
        $region44: #{tpu_custom_call.1} parent=19 // pred_fallthru
          _
        // Predicated region
        $region45: #{tpu_custom_call.1} parent=19 // pred_check
          %p383 = pneg %p211
        $region46: #{tpu_custom_call.1} parent=19 // pred_check_branch
          %385 = sbr.rel (%p383) target = $region48
        $region47: #{tpu_custom_call.1} parent=19 // pred_region
          %p386 = scmp.lt.s32.totalorder %s31, 3
          %s387 = scalar_select %p386, %s31, 3
          %s388 = scalar_lea.vmem %s6, %s387
        $region48: #{tpu_custom_call.1} parent=19 // pred_fallthru
          _
        // Predicated region
        $region49: #{tpu_custom_call.1} parent=19 // pred_check
          %p389 = pneg %p237
        $region50: #{tpu_custom_call.1} parent=19 // pred_check_branch
          %391 = sbr.rel (%p389) target = $region52
        $region51: #{tpu_custom_call.1} parent=19 // pred_region
          %p392 = scmp.lt.s32.totalorder %s31, 3
          %s393 = scalar_select %p392, %s31, 3
          %s394 = smul.addr %s393, 8
          %s395 = scalar_lea.vmem %s7, %s394
        $region52: #{tpu_custom_call.1} parent=19 // pred_fallthru
          _
      $region20: #{tpu_custom_call.1} parent=5 // pred_fallthru
        _
      %p396 = scmp.le.s32.totalorder 1, %s23
      %p397 = scmp.lt.s32.totalorder %s23, 9
      %p398 = pnand %p396, %p397
      %p399 = pneg %p398
      // Predicated region
      $region53: #{tpu_custom_call.1} parent=5 // pred_check
        _
      $region54: #{tpu_custom_call.1} parent=5 // pred_check_branch
        %401 = sbr.rel (%p398) target = $region56
      $region55: #{tpu_custom_call.1} parent=5 // pred_region
        %s402 = ssub.s32 %s23, 1
        %p403 = scmp.lt.s32.totalorder %s32, 1
        %s404 = scalar_select %p403, %s32, 1
        %s405 = smul.addr %s404, 8
        %s406 = scalar_lea.vmem %s0, %s405
        %p407 = pneg %p61
        %p408 = pneg %p58
        %p409 = scmp.lt.s32.totalorder %s33, 3
        %s410 = scalar_select %p409, %s33, 3
        %s411 = smul.addr %s410, 4
        %s412 = smul.addr %s411, 8
        %s413 = scalar_lea.vmem %s1, %s412
        %p414 = pneg %p87
        %p415 = pneg %p84
        %p416 = scmp.lt.s32.totalorder %s33, 3
        %s417 = scalar_select %p416, %s33, 3
        %s418 = scalar_lea.vmem %s2, %s417
        %p419 = pneg %p113
        %p420 = pneg %p110
        %p421 = scmp.lt.s32.totalorder %s33, 3
        %s422 = scalar_select %p421, %s33, 3
        %s423 = smul.addr %s422, 4
        %s424 = smul.addr %s423, 8
        %s425 = scalar_lea.vmem %s3, %s424
        %p426 = pneg %p139
        %p427 = pneg %p136
        %p428 = scmp.lt.s32.totalorder %s33, 3
        %s429 = scalar_select %p428, %s33, 3
        %s430 = scalar_lea.vmem %s4, %s429
        %p431 = pneg %p165
        %p432 = pneg %p162
        %p433 = scmp.lt.s32.totalorder %s33, 3
        %s434 = scalar_select %p433, %s33, 3
        %s435 = smul.addr %s434, 4
        %s436 = smul.addr %s435, 8
        %s437 = scalar_lea.vmem %s5, %s436
        %p438 = pneg %p191
        %p439 = pneg %p188
        %p440 = scmp.lt.s32.totalorder %s33, 3
        %s441 = scalar_select %p440, %s33, 3
        %s442 = scalar_lea.vmem %s6, %s441
        %p443 = pneg %p217
        %p444 = pneg %p214
        %p445 = scmp.lt.s32.totalorder %s33, 3
        %s446 = scalar_select %p445, %s33, 3
        %s447 = smul.addr %s446, 8
        %s448 = scalar_lea.vmem %s7, %s447
        %p449 = pneg %p243
        %p450 = pneg %p240
        %p451 = pneg %p264
        %p452 = pneg %p261
        %p453 = pneg %p290
        %p454 = pneg %p287
        %s455 = sand.u32 %s277, 1
        %s456 = scalar_lea.sflag [#allocation3], %s455
        %s457 = sand.u32 %s277, 1
        %s458 = smul.addr %s457, 8
        %s459 = scalar_lea.vmem [#allocation2], %s458
        %p460 = pneg %p318
        %p461 = pneg %p315
        %s462 = sand.u32 %s305, 1
        %s463 = scalar_lea.sflag [#allocation5], %s462
        %s464 = sand.u32 %s305, 1
        %s465 = smul.addr %s464, 8
        %s466 = scalar_lea.vmem [#allocation4], %s465
        %p467 = scmp.lt.s32.totalorder %s32, 1
        %s468 = scalar_select %p467, %s32, 1
        %s469 = smul.addr %s468, 8
        %s470 = scalar_lea.vmem %s0, %s469
        %p471 = scmp.lt.s32.totalorder %s33, 3
        %s472 = scalar_select %p471, %s33, 3
        %s473 = smul.addr %s472, 4
        %s474 = smul.addr %s473, 8
        %s475 = scalar_lea.vmem %s1, %s474
        %p476 = scmp.lt.s32.totalorder %s33, 3
        %s477 = scalar_select %p476, %s33, 3
        %s478 = scalar_lea.vmem %s2, %s477
        %p479 = scmp.lt.s32.totalorder %s33, 3
        %s480 = scalar_select %p479, %s33, 3
        %s481 = smul.addr %s480, 4
        %s482 = smul.addr %s481, 8
        %s483 = scalar_lea.vmem %s3, %s482
        %p484 = scmp.lt.s32.totalorder %s33, 3
        %s485 = scalar_select %p484, %s33, 3
        %s486 = scalar_lea.vmem %s4, %s485
        %p487 = scmp.lt.s32.totalorder %s33, 3
        %s488 = scalar_select %p487, %s33, 3
        %s489 = smul.addr %s488, 4
        %s490 = smul.addr %s489, 8
        %s491 = scalar_lea.vmem %s5, %s490
        %p492 = scmp.lt.s32.totalorder %s33, 3
        %s493 = scalar_select %p492, %s33, 3
        %s494 = scalar_lea.vmem %s6, %s493
        %p495 = scmp.lt.s32.totalorder %s33, 3
        %s496 = scalar_select %p495, %s33, 3
        %s497 = smul.addr %s496, 8
        %s498 = scalar_lea.vmem %s7, %s497
        %v499 = vld [vmem:[%s470] sm:$0xff]
        %v500 = vld [vmem:[%s475] sm:$0xff]
        %v501 = vld [vmem:[%s475 + $0x8] sm:$0xff]
        %v502 = vld [vmem:[%s475 + $0x10] sm:$0xff]
        %v503 = vld [vmem:[%s475 + $0x18] sm:$0xff]
        %v504 = vld [vmem:[%s483] sm:$0xff]
        %v505 = vld [vmem:[%s483 + $0x8] sm:$0xff]
        %v506 = vld [vmem:[%s483 + $0x10] sm:$0xff]
        %v507 = vld [vmem:[%s483 + $0x18] sm:$0xff]
        %v508 = vld [vmem:[%s491] sm:$0xff]
        %v509 = vld [vmem:[%s491 + $0x8] sm:$0xff]
        %v510 = vld [vmem:[%s491 + $0x10] sm:$0xff]
        %v511 = vld [vmem:[%s491 + $0x18] sm:$0xff]
        %v512 = vld [vmem:[%s498] sm:$0xff]
        %v513 = vld [vmem:[%s478] sm:$0x1]
        %v515 = vlaneseq
        %v516 = vshrl.u32 %v515, 7
        %v517 = vsub.s32 0, %v516
        %v518 = vrot.slane %v513, %v517
        %vm520 = vcmask 261120
        %v522 = vsel %vm520, %v499, 0
        %524 = vmatprep.subr.mxu0 0.0
        %525 = vmatpush1.msra.mxu0 0.0
        %526 = vmatprep.subr.mxu0 0.0
        %527 = vmatpush1.msra.mxu0 0.0
        %528 = vmatprep.subr.mxu0 0.0
        %529 = vmatpush1.msra.mxu0 0.0
        %530 = vmatprep.subr.mxu0 0.0
        %531 = vmatpush1.msra.mxu0 0.0
        %532 = vmatprep.subr.mxu0 0.0
        %533 = vmatpush1.msra.mxu0 0.0
        %534 = vmatprep.subr.mxu0 0.0
        %535 = vmatpush1.msra.mxu0 0.0
        %536 = vmatprep.subr.mxu0 0.0
        %537 = vmatpush1.msra.mxu0 0.0
        %538 = vmatprep.subr.mxu0 0.0
        %539 = vmatpush1.msra.mxu0 0.0
        %540 = vmatprep.subr.mxu0 0.0
        %541 = vmatpush1.msra.mxu0 0.0
        %542 = vmatprep.subr.mxu0 0.0
        %543 = vmatpush1.msra.mxu0 0.0
        %544 = vmatprep.subr.mxu0 0.0
        %545 = vmatpush1.msra.mxu0 0.0
        %546 = vmatprep.subr.mxu0 0.0
        %547 = vmatpush1.msra.mxu0 0.0
        %548 = vmatprep.subr.mxu0 0.0
        %549 = vmatpush1.msra.mxu0 %v503
        %550 = vmatprep.subr.mxu0 0.0
        %551 = vmatpush1.msra.mxu0 %v502
        %552 = vmatprep.subr.mxu0 0.0
        %553 = vmatpush1.msra.mxu0 %v501
        %554 = vmatprep.subr.mxu0 0.0
        %555 = vmatpush1.msra.mxu0 %v500
        %556 = vmatprep.subr.mxu0 0.0
        %557 = vmatpush2.msra.mxu0 0.0
        %558 = vmatprep.subr.mxu0 0.0
        %559 = vmatpush2.msra.mxu0 0.0
        %560 = vmatprep.subr.mxu0 0.0
        %561 = vmatpush2.msra.mxu0 0.0
        %562 = vmatprep.subr.mxu0 0.0
        %563 = vmatpush2.msra.mxu0 0.0
        %564 = vmatprep.subr.mxu0 0.0
        %565 = vmatpush2.msra.mxu0 0.0
        %566 = vmatprep.subr.mxu0 0.0
        %567 = vmatpush2.msra.mxu0 0.0
        %568 = vmatprep.subr.mxu0 0.0
        %569 = vmatpush2.msra.mxu0 0.0
        %570 = vmatprep.subr.mxu0 0.0
        %571 = vmatpush2.msra.mxu0 0.0
        %572 = vmatprep.subr.mxu0 0.0
        %573 = vmatpush2.msra.mxu0 0.0
        %574 = vmatprep.subr.mxu0 0.0
        %575 = vmatpush2.msra.mxu0 0.0
        %576 = vmatprep.subr.mxu0 0.0
        %577 = vmatpush2.msra.mxu0 0.0
        %578 = vmatprep.subr.mxu0 0.0
        %579 = vmatpush2.msra.mxu0 0.0
        %580 = vmatprep.subr.mxu0 0.0
        %581 = vmatpush2.msra.mxu0 0.0
        %582 = vmatprep.subr.mxu0 0.0
        %583 = vmatpush2.msra.mxu0 0.0
        %584 = vmatprep.subr.mxu0 0.0
        %585 = vmatpush2.msra.mxu0 0.0
        %586 = vmatprep.subr.mxu0 0.0
        %587 = vmatpush2.msra.mxu0 0.0
        %588 = vmatprep.mubr.f32.mxu0 0.0
        %589 = vmatmul.mubr.f32.gmra.mxu0 %v522
        %v590 = vpop.f32.mrf.mxu0
        %v591 = vadd.f32 %v518, %v590
        %v592 = vpop.f32.mrf.mxu0
        %593 = vdwg.mxu0
        %v594 = vmul.f32 %v591, 0.35355338
        %v595 = vld [vmem:[%s486] sm:$0x1]
        %v597 = vlaneseq
        %v598 = vshrl.u32 %v597, 7
        %v599 = vsub.s32 0, %v598
        %v600 = vrot.slane %v595, %v599
        %602 = vmatprep.subr.mxu0 0.0
        %603 = vmatpush1.msra.mxu0 0.0
        %604 = vmatprep.subr.mxu0 0.0
        %605 = vmatpush1.msra.mxu0 0.0
        %606 = vmatprep.subr.mxu0 0.0
        %607 = vmatpush1.msra.mxu0 0.0
        %608 = vmatprep.subr.mxu0 0.0
        %609 = vmatpush1.msra.mxu0 0.0
        %610 = vmatprep.subr.mxu0 0.0
        %611 = vmatpush1.msra.mxu0 0.0
        %612 = vmatprep.subr.mxu0 0.0
        %613 = vmatpush1.msra.mxu0 0.0
        %614 = vmatprep.subr.mxu0 0.0
        %615 = vmatpush1.msra.mxu0 0.0
        %616 = vmatprep.subr.mxu0 0.0
        %617 = vmatpush1.msra.mxu0 0.0
        %618 = vmatprep.subr.mxu0 0.0
        %619 = vmatpush1.msra.mxu0 0.0
        %620 = vmatprep.subr.mxu0 0.0
        %621 = vmatpush1.msra.mxu0 0.0
        %622 = vmatprep.subr.mxu0 0.0
        %623 = vmatpush1.msra.mxu0 0.0
        %624 = vmatprep.subr.mxu0 0.0
        %625 = vmatpush1.msra.mxu0 0.0
        %626 = vmatprep.subr.mxu0 0.0
        %627 = vmatpush1.msra.mxu0 %v507
        %628 = vmatprep.subr.mxu0 0.0
        %629 = vmatpush1.msra.mxu0 %v506
        %630 = vmatprep.subr.mxu0 0.0
        %631 = vmatpush1.msra.mxu0 %v505
        %632 = vmatprep.subr.mxu0 0.0
        %633 = vmatpush1.msra.mxu0 %v504
        %634 = vmatprep.subr.mxu0 0.0
        %635 = vmatpush2.msra.mxu0 0.0
        %636 = vmatprep.subr.mxu0 0.0
        %637 = vmatpush2.msra.mxu0 0.0
        %638 = vmatprep.subr.mxu0 0.0
        %639 = vmatpush2.msra.mxu0 0.0
        %640 = vmatprep.subr.mxu0 0.0
        %641 = vmatpush2.msra.mxu0 0.0
        %642 = vmatprep.subr.mxu0 0.0
        %643 = vmatpush2.msra.mxu0 0.0
        %644 = vmatprep.subr.mxu0 0.0
        %645 = vmatpush2.msra.mxu0 0.0
        %646 = vmatprep.subr.mxu0 0.0
        %647 = vmatpush2.msra.mxu0 0.0
        %648 = vmatprep.subr.mxu0 0.0
        %649 = vmatpush2.msra.mxu0 0.0
        %650 = vmatprep.subr.mxu0 0.0
        %651 = vmatpush2.msra.mxu0 0.0
        %652 = vmatprep.subr.mxu0 0.0
        %653 = vmatpush2.msra.mxu0 0.0
        %654 = vmatprep.subr.mxu0 0.0
        %655 = vmatpush2.msra.mxu0 0.0
        %656 = vmatprep.subr.mxu0 0.0
        %657 = vmatpush2.msra.mxu0 0.0
        %658 = vmatprep.subr.mxu0 0.0
        %659 = vmatpush2.msra.mxu0 0.0
        %660 = vmatprep.subr.mxu0 0.0
        %661 = vmatpush2.msra.mxu0 0.0
        %662 = vmatprep.subr.mxu0 0.0
        %663 = vmatpush2.msra.mxu0 0.0
        %664 = vmatprep.subr.mxu0 0.0
        %665 = vmatpush2.msra.mxu0 0.0
        %666 = vmatprep.mubr.f32.mxu0 0.0
        %667 = vmatmul.mubr.f32.gmra.mxu0 %v522
        %v668 = vpop.f32.mrf.mxu0
        %v669 = vadd.f32 %v600, %v668
        %v670 = vpop.f32.mrf.mxu0
        %671 = vdwg.mxu0
        %v672 = vld [vmem:[%s494] sm:$0x1]
        %v674 = vlaneseq
        %v675 = vshrl.u32 %v674, 7
        %v676 = vsub.s32 0, %v675
        %v677 = vrot.slane %v672, %v676
        %679 = vmatprep.subr.mxu0 0.0
        %680 = vmatpush1.msra.mxu0 0.0
        %681 = vmatprep.subr.mxu0 0.0
        %682 = vmatpush1.msra.mxu0 0.0
        %683 = vmatprep.subr.mxu0 0.0
        %684 = vmatpush1.msra.mxu0 0.0
        %685 = vmatprep.subr.mxu0 0.0
        %686 = vmatpush1.msra.mxu0 0.0
        %687 = vmatprep.subr.mxu0 0.0
        %688 = vmatpush1.msra.mxu0 0.0
        %689 = vmatprep.subr.mxu0 0.0
        %690 = vmatpush1.msra.mxu0 0.0
        %691 = vmatprep.subr.mxu0 0.0
        %692 = vmatpush1.msra.mxu0 0.0
        %693 = vmatprep.subr.mxu0 0.0
        %694 = vmatpush1.msra.mxu0 0.0
        %695 = vmatprep.subr.mxu0 0.0
        %696 = vmatpush1.msra.mxu0 0.0
        %697 = vmatprep.subr.mxu0 0.0
        %698 = vmatpush1.msra.mxu0 0.0
        %699 = vmatprep.subr.mxu0 0.0
        %700 = vmatpush1.msra.mxu0 0.0
        %701 = vmatprep.subr.mxu0 0.0
        %702 = vmatpush1.msra.mxu0 0.0
        %703 = vmatprep.subr.mxu0 0.0
        %704 = vmatpush1.msra.mxu0 %v511
        %705 = vmatprep.subr.mxu0 0.0
        %706 = vmatpush1.msra.mxu0 %v510
        %707 = vmatprep.subr.mxu0 0.0
        %708 = vmatpush1.msra.mxu0 %v509
        %709 = vmatprep.subr.mxu0 0.0
        %710 = vmatpush1.msra.mxu0 %v508
        %711 = vmatprep.subr.mxu0 0.0
        %712 = vmatpush2.msra.mxu0 0.0
        %713 = vmatprep.subr.mxu0 0.0
        %714 = vmatpush2.msra.mxu0 0.0
        %715 = vmatprep.subr.mxu0 0.0
        %716 = vmatpush2.msra.mxu0 0.0
        %717 = vmatprep.subr.mxu0 0.0
        %718 = vmatpush2.msra.mxu0 0.0
        %719 = vmatprep.subr.mxu0 0.0
        %720 = vmatpush2.msra.mxu0 0.0
        %721 = vmatprep.subr.mxu0 0.0
        %722 = vmatpush2.msra.mxu0 0.0
        %723 = vmatprep.subr.mxu0 0.0
        %724 = vmatpush2.msra.mxu0 0.0
        %725 = vmatprep.subr.mxu0 0.0
        %726 = vmatpush2.msra.mxu0 0.0
        %727 = vmatprep.subr.mxu0 0.0
        %728 = vmatpush2.msra.mxu0 0.0
        %729 = vmatprep.subr.mxu0 0.0
        %730 = vmatpush2.msra.mxu0 0.0
        %731 = vmatprep.subr.mxu0 0.0
        %732 = vmatpush2.msra.mxu0 0.0
        %733 = vmatprep.subr.mxu0 0.0
        %734 = vmatpush2.msra.mxu0 0.0
        %735 = vmatprep.subr.mxu0 0.0
        %736 = vmatpush2.msra.mxu0 0.0
        %737 = vmatprep.subr.mxu0 0.0
        %738 = vmatpush2.msra.mxu0 0.0
        %739 = vmatprep.subr.mxu0 0.0
        %740 = vmatpush2.msra.mxu0 0.0
        %741 = vmatprep.subr.mxu0 0.0
        %742 = vmatpush2.msra.mxu0 0.0
        %743 = vmatprep.mubr.f32.mxu0 0.0
        %744 = vmatmul.mubr.f32.gmra.mxu0 %v522
        %v745 = vpop.f32.mrf.mxu0
        %v746 = vadd.f32 %v677, %v745
        %v747 = vpop.f32.mrf.mxu0
        %748 = vdwg.mxu0
        %vm749 = vcmask 64512
        %v751 = vsel %vm749, %v594, 0
        %v754 = vsel %vm749, %v669, 0
        %756 = vmatprep.subr.mxu0 0.0
        %757 = vmatpush1.xpose.msra.mxu0 0.0
        %758 = vmatprep.subr.mxu0 0.0
        %759 = vmatpush1.xpose.msra.mxu0 0.0
        %760 = vmatprep.subr.mxu0 0.0
        %761 = vmatpush1.xpose.msra.mxu0 0.0
        %762 = vmatprep.subr.mxu0 0.0
        %763 = vmatpush1.xpose.msra.mxu0 0.0
        %764 = vmatprep.subr.mxu0 0.0
        %765 = vmatpush1.xpose.msra.mxu0 0.0
        %766 = vmatprep.subr.mxu0 0.0
        %767 = vmatpush1.xpose.msra.mxu0 0.0
        %768 = vmatprep.subr.mxu0 0.0
        %769 = vmatpush1.xpose.msra.mxu0 0.0
        %770 = vmatprep.subr.mxu0 0.0
        %771 = vmatpush1.xpose.msra.mxu0 0.0
        %772 = vmatprep.subr.mxu0 0.0
        %773 = vmatpush1.xpose.msra.mxu0 0.0
        %774 = vmatprep.subr.mxu0 0.0
        %775 = vmatpush1.xpose.msra.mxu0 0.0
        %776 = vmatprep.subr.mxu0 0.0
        %777 = vmatpush1.xpose.msra.mxu0 0.0
        %778 = vmatprep.subr.mxu0 0.0
        %779 = vmatpush1.xpose.msra.mxu0 0.0
        %780 = vmatprep.subr.mxu0 0.0
        %781 = vmatpush1.xpose.msra.mxu0 0.0
        %782 = vmatprep.subr.mxu0 0.0
        %783 = vmatpush1.xpose.msra.mxu0 0.0
        %784 = vmatprep.subr.mxu0 0.0
        %785 = vmatpush1.xpose.msra.mxu0 0.0
        %786 = vmatprep.subr.mxu0 0.0
        %787 = vmatpush1.xpose.msra.mxu0 %v754
        %788 = vmatprep.subr.mxu0 0.0
        %789 = vmatpush2.xpose.msra.mxu0 0.0
        %790 = vmatprep.subr.mxu0 0.0
        %791 = vmatpush2.xpose.msra.mxu0 0.0
        %792 = vmatprep.subr.mxu0 0.0
        %793 = vmatpush2.xpose.msra.mxu0 0.0
        %794 = vmatprep.subr.mxu0 0.0
        %795 = vmatpush2.xpose.msra.mxu0 0.0
        %796 = vmatprep.subr.mxu0 0.0
        %797 = vmatpush2.xpose.msra.mxu0 0.0
        %798 = vmatprep.subr.mxu0 0.0
        %799 = vmatpush2.xpose.msra.mxu0 0.0
        %800 = vmatprep.subr.mxu0 0.0
        %801 = vmatpush2.xpose.msra.mxu0 0.0
        %802 = vmatprep.subr.mxu0 0.0
        %803 = vmatpush2.xpose.msra.mxu0 0.0
        %804 = vmatprep.subr.mxu0 0.0
        %805 = vmatpush2.xpose.msra.mxu0 0.0
        %806 = vmatprep.subr.mxu0 0.0
        %807 = vmatpush2.xpose.msra.mxu0 0.0
        %808 = vmatprep.subr.mxu0 0.0
        %809 = vmatpush2.xpose.msra.mxu0 0.0
        %810 = vmatprep.subr.mxu0 0.0
        %811 = vmatpush2.xpose.msra.mxu0 0.0
        %812 = vmatprep.subr.mxu0 0.0
        %813 = vmatpush2.xpose.msra.mxu0 0.0
        %814 = vmatprep.subr.mxu0 0.0
        %815 = vmatpush2.xpose.msra.mxu0 0.0
        %816 = vmatprep.subr.mxu0 0.0
        %817 = vmatpush2.xpose.msra.mxu0 0.0
        %818 = vmatprep.subr.mxu0 0.0
        %819 = vmatpush2.xpose.msra.mxu0 0.0
        %820 = vmatprep.mubr.f32.mxu0 0.0
        %821 = vmatmul.mubr.f32.gmra.mxu0 %v751
        %v822 = vpop.f32.mrf.mxu0
        %v823 = vadd.f32 0.0, %v822
        %v824 = vpop.f32.mrf.mxu0
        %825 = vdwg.mxu0
        %v826 = vsel %vm749, %v823, -inf
        %827 = vmax.xlane.f32.xlu0 %v826
        %v828 = vpop.xlane.xlu0 %827
        %v829 = vsub.f32 %v823, %v828
        %v830 = vmul.f32 %v829, 1.442695
        %v831 = vpow.pop %v830
        %v832 = vsel %vm749, %v831, 0.0
        %833 = vadd.xlane.f32.xlu0 %v832
        %v834 = vpop.xlane.xlu0 %833
        %v835 = vrcp.pop %v834
        %v836 = vmul.f32 %v831, %v835
        %837 = vst.msk [vmem:[%s466] sm:$0xff] %vm749, %v836
        %v839 = vsel %vm749, %v836, 0
        %841 = vmatprep.subr.mxu0 0.0
        %842 = vmatpush1.msra.mxu0 0.0
        %843 = vmatprep.subr.mxu0 0.0
        %844 = vmatpush1.msra.mxu0 0.0
        %845 = vmatprep.subr.mxu0 0.0
        %846 = vmatpush1.msra.mxu0 0.0
        %847 = vmatprep.subr.mxu0 0.0
        %848 = vmatpush1.msra.mxu0 0.0
        %849 = vmatprep.subr.mxu0 0.0
        %850 = vmatpush1.msra.mxu0 0.0
        %851 = vmatprep.subr.mxu0 0.0
        %852 = vmatpush1.msra.mxu0 0.0
        %853 = vmatprep.subr.mxu0 0.0
        %854 = vmatpush1.msra.mxu0 0.0
        %855 = vmatprep.subr.mxu0 0.0
        %856 = vmatpush1.msra.mxu0 0.0
        %857 = vmatprep.subr.mxu0 0.0
        %858 = vmatpush1.msra.mxu0 0.0
        %859 = vmatprep.subr.mxu0 0.0
        %860 = vmatpush1.msra.mxu0 0.0
        %861 = vmatprep.subr.mxu0 0.0
        %862 = vmatpush1.msra.mxu0 0.0
        %863 = vmatprep.subr.mxu0 0.0
        %864 = vmatpush1.msra.mxu0 0.0
        %865 = vmatprep.subr.mxu0 0.0
        %866 = vmatpush1.msra.mxu0 0.0
        %867 = vmatprep.subr.mxu0 0.0
        %868 = vmatpush1.msra.mxu0 0.0
        %869 = vmatprep.subr.mxu0 0.0
        %870 = vmatpush1.msra.mxu0 0.0
        %871 = vmatprep.subr.mxu0 0.0
        %872 = vmatpush1.msra.mxu0 %v746
        %873 = vmatprep.subr.mxu0 0.0
        %874 = vmatpush2.msra.mxu0 0.0
        %875 = vmatprep.subr.mxu0 0.0
        %876 = vmatpush2.msra.mxu0 0.0
        %877 = vmatprep.subr.mxu0 0.0
        %878 = vmatpush2.msra.mxu0 0.0
        %879 = vmatprep.subr.mxu0 0.0
        %880 = vmatpush2.msra.mxu0 0.0
        %881 = vmatprep.subr.mxu0 0.0
        %882 = vmatpush2.msra.mxu0 0.0
        %883 = vmatprep.subr.mxu0 0.0
        %884 = vmatpush2.msra.mxu0 0.0
        %885 = vmatprep.subr.mxu0 0.0
        %886 = vmatpush2.msra.mxu0 0.0
        %887 = vmatprep.subr.mxu0 0.0
        %888 = vmatpush2.msra.mxu0 0.0
        %889 = vmatprep.subr.mxu0 0.0
        %890 = vmatpush2.msra.mxu0 0.0
        %891 = vmatprep.subr.mxu0 0.0
        %892 = vmatpush2.msra.mxu0 0.0
        %893 = vmatprep.subr.mxu0 0.0
        %894 = vmatpush2.msra.mxu0 0.0
        %895 = vmatprep.subr.mxu0 0.0
        %896 = vmatpush2.msra.mxu0 0.0
        %897 = vmatprep.subr.mxu0 0.0
        %898 = vmatpush2.msra.mxu0 0.0
        %899 = vmatprep.subr.mxu0 0.0
        %900 = vmatpush2.msra.mxu0 0.0
        %901 = vmatprep.subr.mxu0 0.0
        %902 = vmatpush2.msra.mxu0 0.0
        %903 = vmatprep.subr.mxu0 0.0
        %904 = vmatpush2.msra.mxu0 0.0
        %905 = vmatprep.mubr.f32.mxu0 0.0
        %906 = vmatmul.mubr.f32.gmra.mxu0 %v839
        %v907 = vpop.f32.mrf.mxu0
        %v908 = vadd.f32 0.0, %v907
        %v909 = vpop.f32.mrf.mxu0
        %910 = vdwg.mxu0
        %v912 = vsel %vm749, %v908, 0
        %914 = vmatprep.subr.mxu0 0.0
        %915 = vmatpush1.msra.mxu0 0.0
        %916 = vmatprep.subr.mxu0 0.0
        %917 = vmatpush1.msra.mxu0 0.0
        %918 = vmatprep.subr.mxu0 0.0
        %919 = vmatpush1.msra.mxu0 0.0
        %920 = vmatprep.subr.mxu0 0.0
        %921 = vmatpush1.msra.mxu0 0.0
        %922 = vmatprep.subr.mxu0 0.0
        %923 = vmatpush1.msra.mxu0 0.0
        %924 = vmatprep.subr.mxu0 0.0
        %925 = vmatpush1.msra.mxu0 0.0
        %926 = vmatprep.subr.mxu0 0.0
        %927 = vmatpush1.msra.mxu0 0.0
        %928 = vmatprep.subr.mxu0 0.0
        %929 = vmatpush1.msra.mxu0 0.0
        %930 = vmatprep.subr.mxu0 0.0
        %931 = vmatpush1.msra.mxu0 0.0
        %932 = vmatprep.subr.mxu0 0.0
        %933 = vmatpush1.msra.mxu0 0.0
        %934 = vmatprep.subr.mxu0 0.0
        %935 = vmatpush1.msra.mxu0 0.0
        %936 = vmatprep.subr.mxu0 0.0
        %937 = vmatpush1.msra.mxu0 0.0
        %938 = vmatprep.subr.mxu0 0.0
        %939 = vmatpush1.msra.mxu0 0.0
        %940 = vmatprep.subr.mxu0 0.0
        %941 = vmatpush1.msra.mxu0 0.0
        %942 = vmatprep.subr.mxu0 0.0
        %943 = vmatpush1.msra.mxu0 0.0
        %944 = vmatprep.subr.mxu0 0.0
        %945 = vmatpush1.msra.mxu0 %v512
        %946 = vmatprep.subr.mxu0 0.0
        %947 = vmatpush2.msra.mxu0 0.0
        %948 = vmatprep.subr.mxu0 0.0
        %949 = vmatpush2.msra.mxu0 0.0
        %950 = vmatprep.subr.mxu0 0.0
        %951 = vmatpush2.msra.mxu0 0.0
        %952 = vmatprep.subr.mxu0 0.0
        %953 = vmatpush2.msra.mxu0 0.0
        %954 = vmatprep.subr.mxu0 0.0
        %955 = vmatpush2.msra.mxu0 0.0
        %956 = vmatprep.subr.mxu0 0.0
        %957 = vmatpush2.msra.mxu0 0.0
        %958 = vmatprep.subr.mxu0 0.0
        %959 = vmatpush2.msra.mxu0 0.0
        %960 = vmatprep.subr.mxu0 0.0
        %961 = vmatpush2.msra.mxu0 0.0
        %962 = vmatprep.subr.mxu0 0.0
        %963 = vmatpush2.msra.mxu0 0.0
        %964 = vmatprep.subr.mxu0 0.0
        %965 = vmatpush2.msra.mxu0 0.0
        %966 = vmatprep.subr.mxu0 0.0
        %967 = vmatpush2.msra.mxu0 0.0
        %968 = vmatprep.subr.mxu0 0.0
        %969 = vmatpush2.msra.mxu0 0.0
        %970 = vmatprep.subr.mxu0 0.0
        %971 = vmatpush2.msra.mxu0 0.0
        %972 = vmatprep.subr.mxu0 0.0
        %973 = vmatpush2.msra.mxu0 0.0
        %974 = vmatprep.subr.mxu0 0.0
        %975 = vmatpush2.msra.mxu0 0.0
        %976 = vmatprep.subr.mxu0 0.0
        %977 = vmatpush2.msra.mxu0 0.0
        %978 = vmatprep.mubr.f32.mxu0 0.0
        %979 = vmatmul.mubr.f32.gmra.mxu0 %v912
        %v980 = vpop.f32.mrf.mxu0
        %v981 = vadd.f32 0.0, %v980
        %v982 = vpop.f32.mrf.mxu0
        %983 = vdwg.mxu0
        %p984 = scmp.eq.s32.totalorder %s33, 0
        // Predicated region
        $region57: #{tpu_custom_call.1} parent=55 // pred_check
          %p985 = pneg %p984
        $region58: #{tpu_custom_call.1} parent=55 // pred_check_branch
          %987 = sbr.rel (%p985) target = $region60
        $region59: #{tpu_custom_call.1} parent=55 // pred_region
          %v988 = vld [vmem:[%s8] sm:$0x1]
          %v990 = vlaneseq
          %v991 = vshrl.u32 %v990, 7
          %v992 = vsub.s32 0, %v991
          %v993 = vrot.slane %v988, %v992
          %v995 = vadd.f32 %v993, %v981
          %996 = vst.msk [vmem:[%s459] sm:$0xff] %vm520, %v995
        $region60: #{tpu_custom_call.1} parent=55 // pred_fallthru
          _
        %p997 = scmp.ne.s32.totalorder %s33, 0
        // Predicated region
        $region61: #{tpu_custom_call.1} parent=55 // pred_check
          %p998 = pneg %p997
        $region62: #{tpu_custom_call.1} parent=55 // pred_check_branch
          %1000 = sbr.rel (%p998) target = $region64
        $region63: #{tpu_custom_call.1} parent=55 // pred_region
          %v1001 = vld [vmem:[%s459] sm:$0xff]
          %v1002 = vadd.f32 %v1001, %v981
          %1003 = vst.msk [vmem:[%s459] sm:$0xff] %vm520, %v1002
        $region64: #{tpu_custom_call.1} parent=55 // pred_fallthru
          _
        %s1004 = sand.u32 %s277, 1
        %s1005 = scalar_lea.sflag [#allocation3], %s1004
        %s1006 = sand.u32 %s277, 1
        %s1007 = smul.addr %s1006, 8
        %s1008 = scalar_lea.vmem [#allocation2], %s1007
        %s1009 = sand.u32 %s305, 1
        %s1010 = scalar_lea.sflag [#allocation5], %s1009
        %s1011 = sand.u32 %s305, 1
        %s1012 = smul.addr %s1011, 8
        %s1013 = scalar_lea.vmem [#allocation4], %s1012
        // Predicated region
        $region65: #{tpu_custom_call.1} parent=55 // pred_check
          %p1014 = pneg %p287
        $region66: #{tpu_custom_call.1} parent=55 // pred_check_branch
          %1016 = sbr.rel (%p1014) target = $region68
        $region67: #{tpu_custom_call.1} parent=55 // pred_region
          %s1018 = ssub.s32 128, 128
          %1019 = vsyncadd %s1005, %s1018
          %s1020 = smul.addr %s32, 128
          %s1021 = scalar_lea.hbm %s9, %s1020
          %s1023 = sshll.u32 %s1008, 4
          %s1024 = int_to_ptr.vmem [resolvable:$true] %s1023
          %1026 = dma.vmem_to_hbm [thread:$0]  %s1024, 128, %s1021, %s1005
        $region68: #{tpu_custom_call.1} parent=55 // pred_fallthru
          _
        // Predicated region
        $region69: #{tpu_custom_call.1} parent=55 // pred_check
          %p1027 = pneg %p315
        $region70: #{tpu_custom_call.1} parent=55 // pred_check_branch
          %1029 = sbr.rel (%p1027) target = $region72
        $region71: #{tpu_custom_call.1} parent=55 // pred_region
          %s1031 = ssub.s32 128, 128
          %1032 = vsyncadd %s1010, %s1031
          %s1033 = smul.addr %s32, 4
          %s1034 = sadd.s32 %s33, %s1033
          %s1035 = smul.addr %s1034, 128
          %s1036 = scalar_lea.hbm %s10, %s1035
          %s1038 = sshll.u32 %s1013, 4
          %s1039 = int_to_ptr.vmem [resolvable:$true] %s1038
          %1041 = dma.vmem_to_hbm [thread:$0]  %s1039, 128, %s1036, %s1010
        $region72: #{tpu_custom_call.1} parent=55 // pred_fallthru
          _
      $region56: #{tpu_custom_call.1} parent=5 // pred_fallthru
        _
      %p1042 = scmp.le.s32.totalorder 2, %s23
      // Predicated region
      $region73: #{tpu_custom_call.1} parent=5 // pred_check
        %p1043 = pneg %p1042
      $region74: #{tpu_custom_call.1} parent=5 // pred_check_branch
        %1045 = sbr.rel (%p1043) target = $region76
      $region75: #{tpu_custom_call.1} parent=5 // pred_region
        %s1046 = ssub.s32 %s23, 2
        // Predicated region
        $region77: #{tpu_custom_call.1} parent=75 // pred_check
          %p1047 = pneg %p293
        $region78: #{tpu_custom_call.1} parent=75 // pred_check_branch
          %1049 = sbr.rel (%p1047) target = $region80
        $region79: #{tpu_custom_call.1} parent=75 // pred_region
          %s1050 = sand.u32 %s278, 1
          %s1051 = scalar_lea.sflag [#allocation3], %s1050
          %s1052 = sand.u32 %s278, 1
          %s1053 = smul.addr %s1052, 8
          %s1054 = scalar_lea.vmem [#allocation2], %s1053
          %1055 = dma.done %s1051, 128
        $region80: #{tpu_custom_call.1} parent=75 // pred_fallthru
          _
        // Predicated region
        $region81: #{tpu_custom_call.1} parent=75 // pred_check
          %p1056 = pneg %p321
        $region82: #{tpu_custom_call.1} parent=75 // pred_check_branch
          %1058 = sbr.rel (%p1056) target = $region84
        $region83: #{tpu_custom_call.1} parent=75 // pred_region
          %s1059 = sand.u32 %s306, 1
          %s1060 = scalar_lea.sflag [#allocation5], %s1059
          %s1061 = sand.u32 %s306, 1
          %s1062 = smul.addr %s1061, 8
          %s1063 = scalar_lea.vmem [#allocation4], %s1062
          %1064 = dma.done %s1060, 128
        $region84: #{tpu_custom_call.1} parent=75 // pred_fallthru
          _
      $region76: #{tpu_custom_call.1} parent=5 // pred_fallthru
        _
    $region6: #{tpu_custom_call.1} parent=1 // loop_footer
      %s27 = sadd.s32 1, %s23
    $region7: #{tpu_custom_call.1} parent=1 // loop_footer_branch
      %22 = sbr.rel target = $region3
    $region8: #{tpu_custom_call.1} parent=1 // loop_exit
      _
    %1065 = vsyncpa [#allocation3], 1
    %s1066 = scalar_lea.sflag [#allocation3], 1
    %1067 = vsyncpa %s1066, 1
    %1068 = vsyncpa [#allocation5], 1
    %s1069 = scalar_lea.sflag [#allocation5], 1
    %1070 = vsyncpa %s1069, 1

</llo_original>
